<compile_context>
chip_gen: v5e
topology: v5e:2x2
jax: 0.10.0
libtpu: 0.0.40
codegen_flags: <defaults>
</compile_context>

<pallas_src>
import jax
import jax.numpy as jnp
from jax.experimental import pallas as pl
from jax.experimental.pallas import tpu as pltpu


def _round_up(x: int, m: int) -> int:
    return ((x + m - 1) // m) * m


def _sublane_rows(dtype) -> int:
    # Rows per sublane tile: 8 for 4-byte, 16 for 2-byte, 32 for 1-byte dtypes.
    return 8 * (4 // jnp.dtype(dtype).itemsize)


def _largest_aligned_divisor(dim: int, align: int, cap: int) -> int:
    """Largest multiple of `align` that divides `dim` (itself a multiple of
    `align`) and is <= cap. Always >= align."""
    units = dim // align
    d = min(units, max(1, cap // align))
    while d > 1 and units % d != 0:
        d -= 1
    return d * align


def _physical_vmem_bytes() -> int:
    try:
        info = pltpu.get_tpu_info()
        v = getattr(info, "vmem_capacity_bytes", None)
        if v:
            return int(v)
    except Exception:
        pass
    return 64 << 20  # conservative fallback: v7x per-TensorCore VMEM


def _meta_linear_kernel_f32out(x_ref, w_ref, b_ref, o_ref):
    """f32 output: accumulate straight into the resident output block."""
    k = pl.program_id(2)

    @pl.when(k == 0)
    def _():
        # Fold the bias into the accumulator init (added exactly once).
        o_ref[...] = jnp.broadcast_to(b_ref[...].astype(o_ref.dtype), o_ref.shape)

    # x:(tm, tk) . w:(tn, tk) contracted on the shared last (K) axis -> (tm, tn)
    o_ref[...] += jax.lax.dot_general(
        x_ref[...],
        w_ref[...],
        dimension_numbers=(((1,), (1,)), ((), ())),
        preferred_element_type=jnp.float32,
    )


def _meta_linear_kernel_acc(x_ref, w_ref, b_ref, o_ref, acc_ref):
    """Narrow-output path: f32 scratch accumulator, cast+store on last k."""
    k = pl.program_id(2)

    @pl.when(k == 0)
    def _():
        acc_ref[...] = jnp.zeros_like(acc_ref)

    acc_ref[...] += jax.lax.dot_general(
        x_ref[...],
        w_ref[...],
        dimension_numbers=(((1,), (1,)), ((), ())),
        preferred_element_type=jnp.float32,
    )

    @pl.when(k == pl.num_programs(2) - 1)
    def _():
        o_ref[...] = (acc_ref[...] + b_ref[...].astype(jnp.float32)).astype(
            o_ref.dtype
        )


def meta_linear(x, weight, bias, *, tm=None, tn=None, tk=None):
    """F.linear(x, weight, bias) == x @ weight.T + bias.

    x:      (..., K)  — arbitrary leading dims, flattened like F.linear
    weight: (N, K)    — native PyTorch nn.Linear layout (NOT transposed)
    bias:   (N,)
    """
    orig_shape = x.shape
    K = orig_shape[-1]
    x2 = x.reshape(-1, K)
    M = x2.shape[0]
    N, K2 = weight.shape
    assert K == K2, (K, K2)
    assert bias.shape == (N,), bias.shape

    out_dtype = x.dtype
    sub_m = _sublane_rows(x2.dtype)

    # --- Per-chip VMEM-aware tile caps -------------------------------------
    vmem_phys = _physical_vmem_bytes()
    big_vmem = vmem_phys >= (96 << 20)        # v5e / v6e (128 MiB) vs v7x (64 MiB)
    tm_cap = 512
    tn_cap = 1024 if big_vmem else 512
    tk_cap = 2048 if big_vmem else 1024

    # --- N, K (weight dims): pad at most to the next multiple of 128, then
    #     pick lane-aligned tiles that divide the padded extent exactly. ------
    if tn is None:
        Np = _round_up(N, 128)
        tn = _largest_aligned_divisor(Np, 128, tn_cap)
    else:
        assert tn % 128 == 0, "tn must be a multiple of 128"
        Np = _round_up(N, tn)
    if tk is None:
        Kp = _round_up(K, 128)
        tk = _largest_aligned_divisor(Kp, 128, tk_cap)
    else:
        assert tk % 128 == 0, "tk must be a multiple of 128"
        Kp = _round_up(K, tk)

    # --- M (activation dim, cheap to pad): dtype-aware sublane rounding. ----
    if tm is None:
        tm = min(_round_up(M, sub_m), tm_cap)
    else:
        assert tm % sub_m == 0, f"tm must be a multiple of {sub_m} for this dtype"
    Mp = _round_up(M, tm)

    # --- v7x megacore: if the whole problem is a single (i, j) block, split
    #     the N axis (halves the weight each core streams) so both TCs work. --
    if Mp // tm == 1 and Np // tn == 1 and tn % 256 == 0:
        tn //= 2

    # --- Padding (correctness-neutral zero padding) -------------------------
    if (Mp, Kp) != (M, K):
        x2 = jnp.pad(x2, ((0, Mp - M), (0, Kp - K)))
    w = weight
    if (Np, Kp) != (N, K):
        w = jnp.pad(w, ((0, Np - N), (0, Kp - K)))
    b = bias if Np == N else jnp.pad(bias, (0, Np - N))
    b2 = b.reshape(1, Np)

    grid = (Mp // tm, Np // tn, Kp // tk)

    use_acc_scratch = out_dtype != jnp.float32
    kernel = _meta_linear_kernel_acc if use_acc_scratch else _meta_linear_kernel_f32out
    scratch_shapes = (
        [pltpu.VMEM((tm, tn), jnp.float32)] if use_acc_scratch else []
    )

    # --- VMEM budget from the tile footprint (+ headroom), chip-aware cap ---
    x_bytes = jnp.dtype(x2.dtype).itemsize
    w_bytes = jnp.dtype(w.dtype).itemsize
    o_bytes = jnp.dtype(out_dtype).itemsize
    b_bytes = jnp.dtype(b2.dtype).itemsize
    footprint = (
        2 * tm * tk * x_bytes                      # double-buffered x tile
        + 2 * tn * tk * w_bytes                    # double-buffered W tile
        + 2 * tm * tn * o_bytes                    # double-buffered out tile
        + 2 * 8 * tn * b_bytes                     # bias tile (sublane-padded)
        + (tm * tn * 4 if use_acc_scratch else 0)  # f32 accumulator scratch
    )
    ceiling = (96 << 20) if big_vmem else (48 << 20)
    vmem_limit = min(max(32 << 20, 2 * footprint), ceiling)
    vmem_limit = max(vmem_limit, footprint + (2 << 20))  # never under-request

    cost = pl.CostEstimate(
        flops=2 * Mp * Np * Kp,
        transcendentals=0,
        bytes_accessed=(
            Mp * Kp * x_bytes + Np * Kp * w_bytes + Np * b_bytes + Mp * Np * o_bytes
        ),
    )

    out = pl.pallas_call(
        kernel,
        out_shape=jax.ShapeDtypeStruct((Mp, Np), out_dtype),
        grid_spec=pltpu.PrefetchScalarGridSpec(
            num_scalar_prefetch=0,
            grid=grid,
            in_specs=[
                pl.BlockSpec((tm, tk), lambda i, j, k: (i, k)),   # x (M, K)
                pl.BlockSpec((tn, tk), lambda i, j, k: (j, k)),   # W (N, K), native
                pl.BlockSpec((1, tn), lambda i, j, k: (0, j)),    # bias (1, N)
            ],
            out_specs=pl.BlockSpec((tm, tn), lambda i, j, k: (i, j)),
            scratch_shapes=scratch_shapes,
        ),
        compiler_params=pltpu.CompilerParams(
            dimension_semantics=("parallel", "parallel", "arbitrary"),
            vmem_limit_bytes=int(vmem_limit),
        ),
        cost_estimate=cost,
    )(x2, w, b2)

    if (Mp, Np) != (M, N):
        out = out[:M, :N]
    return out.reshape(orig_shape[:-1] + (N,))


if __name__ == "__main__":
    key = jax.random.PRNGKey(0)

    # --- Test 1: MetaLinear(in_features=32, out_features=64), batch=8 ------
    in_features, out_features, batch = 32, 64, 8
    kx, kw, kb, k2x, k2w, k2b = jax.random.split(key, 6)

    bound = 1.0 / (in_features ** 0.5)
    x = jax.random.normal(kx, (batch, in_features), dtype=jnp.float32)
    weight = jax.random.uniform(
        kw, (out_features, in_features), minval=-bound, maxval=bound,
        dtype=jnp.float32,
    )
    bias = jax.random.uniform(
        kb, (out_features,), minval=-bound, maxval=bound, dtype=jnp.float32
    )

    out = jax.block_until_ready(meta_linear(x, weight, bias))
    ref = x @ weight.T + bias
    assert out.shape == (batch, out_features)
    assert jnp.allclose(out, ref, atol=1e-5, rtol=1e-5)

    # --- Test 2: non-aligned shapes + leading batch dims (padding path) ----
    B, S, K2_, N2_ = 2, 5, 100, 70
    bound2 = 1.0 / (K2_ ** 0.5)
    x2 = jax.random.normal(k2x, (B, S, K2_), dtype=jnp.float32)
    w2 = jax.random.uniform(
        k2w, (N2_, K2_), minval=-bound2, maxval=bound2, dtype=jnp.float32
    )
    b2 = jax.random.uniform(
        k2b, (N2_,), minval=-bound2, maxval=bound2, dtype=jnp.float32
    )

    out2 = jax.block_until_ready(meta_linear(x2, w2, b2))
    ref2 = jnp.einsum("bsk,nk->bsn", x2, w2) + b2
    assert out2.shape == (B, S, N2_)
    assert jnp.allclose(out2, ref2, atol=1e-5, rtol=1e-5)

    # --- Test 3: bf16 inputs (scratch-accumulator path, 16-row sublanes) ---
    x3 = x.astype(jnp.bfloat16)
    w3 = weight.astype(jnp.bfloat16)
    b3 = bias.astype(jnp.bfloat16)
    out3 = jax.block_until_ready(meta_linear(x3, w3, b3))
    ref3 = (x3.astype(jnp.float32) @ w3.astype(jnp.float32).T
            + b3.astype(jnp.float32))
    assert out3.shape == (batch, out_features)
    assert out3.dtype == jnp.bfloat16
    assert jnp.allclose(out3.astype(jnp.float32), ref3, atol=3e-2, rtol=3e-2)

    print("KERNEL_OK")
</pallas_src>

<mosaic_0001>
module attributes {stable_mosaic.version = 11 : i64} {
  func.func @_meta_linear_kernel_f32out(%arg0: i32, %arg1: i32, %arg2: i32, %arg3: memref<8x128xf32, #tpu.memory_space<vmem>>, %arg4: memref<128x128xf32, #tpu.memory_space<vmem>>, %arg5: memref<1x128xf32, #tpu.memory_space<vmem>>, %arg6: memref<8x128xf32, #tpu.memory_space<vmem>>) attributes {dimension_semantics = [#tpu.dimension_semantics<parallel>, #tpu.dimension_semantics<parallel>, #tpu.dimension_semantics<arbitrary>], iteration_bounds = array<i64: 1, 1, 1>, scalar_prefetch = 0 : i64, scratch_operands = 0 : i64, tpu.core_type = #tpu.core_type<tc>, window_params = [{transform_indices = @transform_0, window_bounds = array<i64: 8, 128>}, {transform_indices = @transform_1, window_bounds = array<i64: 128, 128>}, {transform_indices = @transform_2, window_bounds = array<i64: 1, 128>}, {transform_indices = @transform_3, window_bounds = array<i64: 8, 128>}]} {
    %c0_i32 = arith.constant 0 : i32
    %0 = arith.cmpi eq, %arg2, %c0_i32 : i32
    %1 = arith.extui %0 : i1 to i32
    %c0_i32_0 = arith.constant 0 : i32
    %2 = arith.cmpi ne, %1, %c0_i32_0 : i32
    scf.if %2 {
      %c0_8 = arith.constant 0 : index
      %c0_9 = arith.constant 0 : index
      %9 = vector.load %arg5[%c0_8, %c0_9] : memref<1x128xf32, #tpu.memory_space<vmem>>, vector<1x128xf32>
      %10 = vector.shape_cast %9 : vector<1x128xf32> to vector<1x128xf32>
      %11 = vector.broadcast %10 : vector<1x128xf32> to vector<8x128xf32>
      %c0_10 = arith.constant 0 : index
      %c0_11 = arith.constant 0 : index
      %12 = vector.load %arg6[%c0_10, %c0_11] : memref<8x128xf32, #tpu.memory_space<vmem>>, vector<8x128xf32>
      tpu.vector_store %arg6[%c0_10, %c0_11], %11 {strides = array<i32>} : memref<8x128xf32, #tpu.memory_space<vmem>>, vector<8x128xf32>,
    } else {
    }
    %c0 = arith.constant 0 : index
    %c0_1 = arith.constant 0 : index
    %3 = vector.load %arg6[%c0, %c0_1] : memref<8x128xf32, #tpu.memory_space<vmem>>, vector<8x128xf32>
    %c0_2 = arith.constant 0 : index
    %c0_3 = arith.constant 0 : index
    %4 = vector.load %arg3[%c0_2, %c0_3] : memref<8x128xf32, #tpu.memory_space<vmem>>, vector<8x128xf32>
    %c0_4 = arith.constant 0 : index
    %c0_5 = arith.constant 0 : index
    %5 = vector.load %arg4[%c0_4, %c0_5] : memref<128x128xf32, #tpu.memory_space<vmem>>, vector<128x128xf32>
    %cst = arith.constant dense<0.000000e+00> : vector<8x128xf32>
    %6 = tpu.matmul %4, %5, %cst {dimension_numbers = #tpu.dot_dimension_numbers<[1], [1], [0], [0], [0, 0, 1, 0], [], []>} : vector<8x128xf32>, vector<128x128xf32>, vector<8x128xf32> -> vector<8x128xf32>
    %7 = arith.addf %3, %6 : vector<8x128xf32>
    %c0_6 = arith.constant 0 : index
    %c0_7 = arith.constant 0 : index
    %8 = vector.load %arg6[%c0_6, %c0_7] : memref<8x128xf32, #tpu.memory_space<vmem>>, vector<8x128xf32>
    tpu.vector_store %arg6[%c0_6, %c0_7], %7 {strides = array<i32>} : memref<8x128xf32, #tpu.memory_space<vmem>>, vector<8x128xf32>,
    return
  }
  func.func @transform_0(%arg0: i32, %arg1: i32, %arg2: i32) -> (i32, i32) {
    %c0_i32 = arith.constant 0 : i32
    return %arg0, %arg2 : i32, i32
  }
  func.func @transform_1(%arg0: i32, %arg1: i32, %arg2: i32) -> (i32, i32) {
    %c0_i32 = arith.constant 0 : i32
    return %arg1, %arg2 : i32, i32
  }
  func.func @transform_2(%arg0: i32, %arg1: i32, %arg2: i32) -> (i32, i32) {
    %c0_i32 = arith.constant 0 : i32
    %c0_i32_0 = arith.constant 0 : i32
    return %c0_i32, %arg1 : i32, i32
  }
  func.func @transform_3(%arg0: i32, %arg1: i32, %arg2: i32) -> (i32, i32) {
    %c0_i32 = arith.constant 0 : i32
    return %arg0, %arg1 : i32, i32
  }
}

</mosaic_0001>

<llo_original>
// kernel: tpu_custom_call.1
$region0: #{tpu_custom_call.1}
  #allocation0 [shape = 'u32[]', space=smem, size = 0x4, offset = 0x4, fixed_abs, tag = 'smem constant byte address 0x4 - core index']
  #allocation1 [shape = 'u32[72,128]{1,0:T(1,128)}', space=vmem, size = 0x9000, scoped, tag = 'internal scratch']
  %s0 = inlined_call_operand.hbm [shape: f32[8,128], index: 0, kind: input, shape index: {}]
  %s1 = inlined_call_operand.hbm [shape: f32[128,128], index: 1, kind: input, shape index: {}]
  %s2 = inlined_call_operand.vmem [shape: f32[1,128], index: 2, kind: input, shape index: {}]
  %s3 = inlined_call_operand.hbm [shape: f32[8,128], index: 3, kind: output, shape index: {}]
  %s4 = sld [smem:[#allocation0]]
  $region34: #{tpu_custom_call.1} parent=0
    _
  %s6 = ssub.s32 1, %s4
  %s7 = scalar_select 0, %s6, %s4
  $region1: #{tpu_custom_call.1} parent=0
    #allocation2 [shape = 'u8[4096]{0}', space=vmem, size = 0x1000, scoped, tag = 'input window, operand 0, single buffered']
    #allocation3 [shape = 's32[1]{0}', space=sflag, size = 0x4, scoped, tag = 'scoped memory for tpu_custom_call.1']
    #allocation4 [shape = 's32[1]{0}', space=sflag, size = 0x4, scoped, tag = 'scoped memory for tpu_custom_call.1']
    #allocation5 [shape = 'u8[65536]{0}', space=vmem, size = 0x10000, scoped, tag = 'input window, operand 1, single buffered']
    #allocation6 [shape = 's32[1]{0}', space=sflag, size = 0x4, scoped, tag = 'scoped memory for tpu_custom_call.1']
    #allocation7 [shape = 'u8[4096]{0}', space=vmem, size = 0x1000, scoped, tag = 'output window, operand 0, single buffered']
    %8 = vsyncpa [#allocation3], 0
    %9 = vsyncpa [#allocation6], 0
    %10 = vsyncpa [#allocation4], 0
    // Predicated region
    $region2: #{tpu_custom_call.1} parent=1 // pred_check
      _
    $region3: #{tpu_custom_call.1} parent=1 // pred_check_branch
      %12 = sbr.rel (0) target = $region5
    $region4: #{tpu_custom_call.1} parent=1 // pred_region
      %14 = vsyncadd [#allocation3], 0
      %s16 = sshll.u32 %s0, 4
      %s17 = int_to_ptr.hbm [resolvable:$true] %s16
      %s18 = sshll.u32 [#allocation2], 4
      %s19 = int_to_ptr.vmem [resolvable:$true] %s18
      %21 = dma.hbm_to_vmem [thread:$0]  %s17, 128, %s19, [#allocation3]
    $region5: #{tpu_custom_call.1} parent=1 // pred_fallthru
      _
    // Predicated region
    $region6: #{tpu_custom_call.1} parent=1 // pred_check
      _
    $region7: #{tpu_custom_call.1} parent=1 // pred_check_branch
      %23 = sbr.rel (0) target = $region9
    $region8: #{tpu_custom_call.1} parent=1 // pred_region
      %25 = vsyncadd [#allocation6], 0
      %s26 = sshll.u32 %s1, 4
      %s27 = int_to_ptr.hbm [resolvable:$true] %s26
      %s28 = sshll.u32 [#allocation5], 4
      %s29 = int_to_ptr.vmem [resolvable:$true] %s28
      %34 = dma.hbm_to_vmem [thread:$0]  %s27, 2048, %s29, [#allocation6], 128, 128, 8
    $region9: #{tpu_custom_call.1} parent=1 // pred_fallthru
      _
    // Predicated region
    $region10: #{tpu_custom_call.1} parent=1 // pred_check
      _
    $region11: #{tpu_custom_call.1} parent=1 // pred_check_branch
      %36 = sbr.rel (0) target = $region13
    $region12: #{tpu_custom_call.1} parent=1 // pred_region
      _
    $region13: #{tpu_custom_call.1} parent=1 // pred_fallthru
      _
    // Predicated region
    $region14: #{tpu_custom_call.1} parent=1 // pred_check
      _
    $region15: #{tpu_custom_call.1} parent=1 // pred_check_branch
      %38 = sbr.rel (0) target = $region17
    $region16: #{tpu_custom_call.1} parent=1 // pred_region
      %40 = dma.done [#allocation3], 128
    $region17: #{tpu_custom_call.1} parent=1 // pred_fallthru
      _
    // Predicated region
    $region18: #{tpu_custom_call.1} parent=1 // pred_check
      _
    $region19: #{tpu_custom_call.1} parent=1 // pred_check_branch
      %42 = sbr.rel (0) target = $region21
    $region20: #{tpu_custom_call.1} parent=1 // pred_region
      %44 = dma.done [#allocation6], 2048
    $region21: #{tpu_custom_call.1} parent=1 // pred_fallthru
      _
    %p45 = scmp.eq.s32.totalorder 0, 0
    // Predicated region
    $region22: #{tpu_custom_call.1} parent=1 // pred_check
      %p46 = pneg %p45
    $region23: #{tpu_custom_call.1} parent=1 // pred_check_branch
      %48 = sbr.rel (%p46) target = $region25
    $region24: #{tpu_custom_call.1} parent=1 // pred_region
      %v49 = vld [vmem:[%s2] sm:$0x1]
      %v51 = vperm.slane %v49, 0
      %53 = vst [vmem:[#allocation7] sm:$0xff] %v51
    $region25: #{tpu_custom_call.1} parent=1 // pred_fallthru
      _
    %v54 = vld [vmem:[#allocation7] sm:$0xff]
    %v55 = vld [vmem:[#allocation2] sm:$0xff]
    %v56 = vld [vmem:[#allocation5] sm:$0xff]
    %v57 = vld [vmem:[#allocation5 + $0x8] sm:$0xff]
    %v58 = vld [vmem:[#allocation5 + $0x10] sm:$0xff]
    %v59 = vld [vmem:[#allocation5 + $0x18] sm:$0xff]
    %v60 = vld [vmem:[#allocation5 + $0x20] sm:$0xff]
    %v61 = vld [vmem:[#allocation5 + $0x28] sm:$0xff]
    %v62 = vld [vmem:[#allocation5 + $0x30] sm:$0xff]
    %v63 = vld [vmem:[#allocation5 + $0x38] sm:$0xff]
    %v64 = vld [vmem:[#allocation5 + $0x40] sm:$0xff]
    %v65 = vld [vmem:[#allocation5 + $0x48] sm:$0xff]
    %v66 = vld [vmem:[#allocation5 + $0x50] sm:$0xff]
    %v67 = vld [vmem:[#allocation5 + $0x58] sm:$0xff]
    %v68 = vld [vmem:[#allocation5 + $0x60] sm:$0xff]
    %v69 = vld [vmem:[#allocation5 + $0x68] sm:$0xff]
    %v70 = vld [vmem:[#allocation5 + $0x70] sm:$0xff]
    %v71 = vld [vmem:[#allocation5 + $0x78] sm:$0xff]
    %72 = vmatpush.xpose.msra.mxu0 %v71
    %73 = vmatpush.xpose.msra.mxu0 %v70
    %74 = vmatpush.xpose.msra.mxu0 %v69
    %75 = vmatpush.xpose.msra.mxu0 %v68
    %76 = vmatpush.xpose.msra.mxu0 %v67
    %77 = vmatpush.xpose.msra.mxu0 %v66
    %78 = vmatpush.xpose.msra.mxu0 %v65
    %79 = vmatpush.xpose.msra.mxu0 %v64
    %80 = vmatpush.xpose.msra.mxu0 %v63
    %81 = vmatpush.xpose.msra.mxu0 %v62
    %82 = vmatpush.xpose.msra.mxu0 %v61
    %83 = vmatpush.xpose.msra.mxu0 %v60
    %84 = vmatpush.xpose.msra.mxu0 %v59
    %85 = vmatpush.xpose.msra.mxu0 %v58
    %86 = vmatpush.xpose.msra.mxu0 %v57
    %87 = vmatpush.xpose.msra.mxu0 %v56
    %88 = vmatmul.f32.gmra.mxu0 %v55
    %v89 = vpop.f32.mrf.mxu0
    %v90 = vadd.f32 0.0, %v89
    %91 = vdwg.mxu0
    %v92 = vadd.f32 %v54, %v90
    %93 = vst [vmem:[#allocation7] sm:$0xff] %v92
    // Predicated region
    $region26: #{tpu_custom_call.1} parent=1 // pred_check
      _
    $region27: #{tpu_custom_call.1} parent=1 // pred_check_branch
      %95 = sbr.rel (0) target = $region29
    $region28: #{tpu_custom_call.1} parent=1 // pred_region
      %97 = vsyncadd [#allocation4], 0
      %s99 = sshll.u32 [#allocation7], 4
      %s100 = int_to_ptr.vmem [resolvable:$true] %s99
      %s101 = sshll.u32 %s3, 4
      %s102 = int_to_ptr.hbm [resolvable:$true] %s101
      %104 = dma.vmem_to_hbm [thread:$0]  %s100, 128, %s102, [#allocation4]
    $region29: #{tpu_custom_call.1} parent=1 // pred_fallthru
      _
    // Predicated region
    $region30: #{tpu_custom_call.1} parent=1 // pred_check
      _
    $region31: #{tpu_custom_call.1} parent=1 // pred_check_branch
      %106 = sbr.rel (0) target = $region33
    $region32: #{tpu_custom_call.1} parent=1 // pred_region
      %108 = dma.done [#allocation4], 128
    $region33: #{tpu_custom_call.1} parent=1 // pred_fallthru
      _
    %109 = vsyncpa [#allocation3], 1
    %110 = vsyncpa [#allocation6], 1
    %111 = vsyncpa [#allocation4], 1

</llo_original>
